<compile_context>
chip_gen: v6e
topology: v6e:2x2x1
jax: 0.10.0
libtpu: 0.0.40
codegen_flags: <defaults>
</compile_context>

<pallas_src>
import functools

import jax
import jax.numpy as jnp
from jax.experimental import pallas as pl
from jax.experimental.pallas import tpu as pltpu


# ----------------------------- Pallas kernel ------------------------------


def _head_matmul_kernel(w_ref, x_ref, b_ref, o_ref, *, compute_dtype):
    # w_ref: (C_out, C_in)   x_ref: (C_in, TILE_HW)   b_ref: (C_out, 1) f32
    # o_ref: (C_out, TILE_HW)  -- spatial axis is the lane (last) dim.
    x = x_ref[...]
    if compute_dtype is not None and x.dtype != compute_dtype:
        # In-VMEM cast: no extra HBM pass (unlike a wrapper-side astype).
        x = x.astype(compute_dtype)
    acc = jnp.dot(w_ref[...], x, preferred_element_type=jnp.float32)
    o_ref[...] = (acc + b_ref[...]).astype(o_ref.dtype)


def _round_up(v, m):
    return (v + m - 1) // m * m


def _fused_1x1_conv(x_nchw, w_t, b_col, *, max_tile_hw=16384,
                    vmem_budget_bytes=12 << 20,
                    compute_dtype=None, out_dtype=None):
    """Fused 1x1 conv for all three heads.

    x_nchw: (B, C_in, H, W)   w_t: (C_out, C_in)   b_col: (C_out, 1) f32
    returns: (B, C_out, H*W)  -- channel-major, identical to the NCHW conv
                                 output flattened over spatial.
    """
    b, c_in, h, w = x_nchw.shape
    hw = h * w
    c_out = w_t.shape[0]
    out_dtype = out_dtype or x_nchw.dtype

    # Free reshape: NCHW is already (B, C, H*W) contiguous. No transpose/copy.
    x3 = x_nchw.reshape(b, c_in, hw)

    # Only the tiny weight matrix is pre-cast for the optional low-precision
    # compute path; x is cast inside the kernel (see _head_matmul_kernel).
    if compute_dtype is not None:
        w_t = w_t.astype(compute_dtype)

    in_bytes = jnp.dtype(x3.dtype).itemsize
    out_bytes = jnp.dtype(out_dtype).itemsize

    # Spatial tile: always a lane-dense multiple of 128; the pl.cdiv grid
    # masks the ragged boundary tile (valid: no reduction over the lane axis,
    # OOB input lanes only feed masked-out output columns).
    tile_hw = min(_round_up(max_tile_hw, 128), _round_up(hw, 128))
    # Clamp by a double-buffered VMEM budget for the x + out tiles so large
    # hw never blows v5e's 16 MiB default scoped VMEM / v7x's 64 MiB VMEM.
    per_lane_bytes = 2 * (c_in * in_bytes + c_out * out_bytes)
    tile_hw = max(128, min(tile_hw,
                           (vmem_budget_bytes // per_lane_bytes) // 128 * 128))

    grid = (b, pl.cdiv(hw, tile_hw))

    # Explicit, sized (not maxed-out) VMEM limit: double-buffered tiles +
    # grid-invariant weights/bias + slack.
    needed = (per_lane_bytes * tile_hw
              + 2 * (c_out * c_in * in_bytes + c_out * 4))
    vmem_limit = int(min(max(needed + (2 << 20), 16 << 20), 48 << 20))

    cost = pl.CostEstimate(
        flops=2 * b * hw * c_in * c_out,
        transcendentals=0,
        bytes_accessed=(b * hw * c_in * in_bytes
                        + b * hw * c_out * out_bytes
                        + c_out * c_in * in_bytes
                        + c_out * 4),
    )

    kernel = functools.partial(_head_matmul_kernel, compute_dtype=compute_dtype)

    return pl.pallas_call(
        kernel,
        out_shape=jax.ShapeDtypeStruct((b, c_out, hw), out_dtype),
        grid_spec=pltpu.PrefetchScalarGridSpec(
            num_scalar_prefetch=0,
            grid=grid,
            in_specs=[
                # Tiny, grid-invariant weight / bias tiles.
                pl.BlockSpec((c_out, c_in), lambda bi, si: (0, 0)),
                # x: batch dim squeezed, full channels, lane-dense spatial tile.
                pl.BlockSpec((None, c_in, tile_hw), lambda bi, si: (bi, 0, si)),
                pl.BlockSpec((c_out, 1), lambda bi, si: (0, 0)),
            ],
            out_specs=pl.BlockSpec((None, c_out, tile_hw),
                                   lambda bi, si: (bi, 0, si)),
        ),
        compiler_params=pltpu.CompilerParams(
            dimension_semantics=("parallel", "parallel"),
            vmem_limit_bytes=vmem_limit),
        cost_estimate=cost,
    )(w_t, x3, b_col)


# ------------------------------ DefaultHead -------------------------------


class DefaultHeadPallas:
    def __init__(
        self,
        num_filters,
        num_class,
        num_anchor_per_loc,
        box_code_size,
        num_direction_bins,
        use_direction_classifier,
        encode_background_as_zeros,
        key,
        dtype=jnp.float32,
        compute_dtype=None,   # e.g. jnp.bfloat16 (best if producer emits bf16)
        out_dtype=None,       # e.g. jnp.bfloat16 on v7x if downstream allows
        max_tile_hw=16384,    # big tiles amortize the ~0.35 us grid-step cost
    ):
        self._num_anchor_per_loc = num_anchor_per_loc
        self._num_direction_bins = num_direction_bins
        self._num_class = num_class
        self._use_direction_classifier = use_direction_classifier
        self._box_code_size = box_code_size
        self._compute_dtype = compute_dtype
        self._out_dtype = out_dtype
        self._max_tile_hw = max_tile_hw

        if encode_background_as_zeros:
            num_cls = num_anchor_per_loc * num_class
        else:
            num_cls = num_anchor_per_loc * (num_class + 1)
        num_box = num_anchor_per_loc * box_code_size
        num_dir = num_anchor_per_loc * num_direction_bins

        self._num_cls_ch = num_cls
        self._num_box_ch = num_box
        self._num_dir_ch = num_dir

        # Deterministic init (PyTorch Conv2d-style U(-bound, bound),
        # bound = 1/sqrt(fan_in); fan_in = num_filters for a 1x1 conv).
        bound = 1.0 / (num_filters ** 0.5)
        keys = jax.random.split(key, 6)

        def uni(k, shape):
            return jax.random.uniform(k, shape, dtype, -bound, bound)

        # Weights stored as (C_out, C_in) so the kernel computes W @ x.
        self.w_cls = uni(keys[0], (num_cls, num_filters))
        self.b_cls = uni(keys[1], (num_cls,))
        self.w_box = uni(keys[2], (num_box, num_filters))
        self.b_box = uni(keys[3], (num_box,))
        if use_direction_classifier:
            self.w_dir = uni(keys[4], (num_dir, num_filters))
            self.b_dir = uni(keys[5], (num_dir,))

        # Fuse the three heads into one matmul: concat along output channels.
        # NOTE: the channel split in __call__ relies on this [cls, box, dir]
        # order -- reordering either side silently corrupts outputs.
        ws = [self.w_cls, self.w_box]
        bs = [self.b_cls, self.b_box]
        if use_direction_classifier:
            ws.append(self.w_dir)
            bs.append(self.b_dir)
        self.w_concat_t = jnp.concatenate(ws, axis=0)              # (C_out, C_in)
        self.b_col = jnp.concatenate(bs, axis=0).astype(jnp.float32)[:, None]

    def __call__(self, x):
        # x: NCHW, matching the PyTorch module.
        b, c_in, h, w = x.shape
        a = self._num_anchor_per_loc

        # Fused 1x1 conv; output is (B, C_out_total, H*W), channel-major ==
        # the NCHW conv output flattened over spatial.
        out = _fused_1x1_conv(x, self.w_concat_t, self.b_col,
                              max_tile_hw=self._max_tile_hw,
                              compute_dtype=self._compute_dtype,
                              out_dtype=self._out_dtype or x.dtype)

        ncls, nbox = self._num_cls_ch, self._num_box_ch

        # TODO(synk): this permute re-reads/re-writes the whole head output
        # (~2 extra HBM passes). In a full model, fuse it into the consumer
        # (sigmoid/decode/loss) or have downstream consume the channel-major
        # (B, A, K, H*W) view directly. Do NOT move it into the kernel's
        # out_spec: that would destroy the lane-dense (K=7/4/2) stores.
        def rearrange(y, per_anchor):
            # (B, A*K, HW) -> (B, A, K, HW) -> (B, A, HW, K) -> (B, A*HW, K)
            # Identical to the PyTorch view/permute (H, W stay adjacent).
            y = y.reshape(b, a, per_anchor, h * w)
            y = jnp.transpose(y, (0, 1, 3, 2))
            return y.reshape(b, -1, per_anchor)

        # NOTE: the PyTorch code views the cls conv output as
        # (B, A, num_class, H, W); that only matches the channel count when
        # encode_background_as_zeros=True (as used here).
        ret = {
            "box_preds": rearrange(out[:, ncls:ncls + nbox], self._box_code_size),
            "cls_preds": rearrange(out[:, :ncls], self._num_class),
        }
        if self._use_direction_classifier:
            ret["dir_cls_preds"] = rearrange(out[:, ncls + nbox:],
                                             self._num_direction_bins)
        return ret


# ------------------------------ reference ---------------------------------


def _reference(head, x):
    """Pure-JAX reference of the PyTorch forward (1x1 conv == einsum)."""
    b, _, h, w = x.shape
    a = head._num_anchor_per_loc

    def conv1x1(wm, bv):
        # wm: (C_out, C_in), output NCHW: (B, C_out, H, W)
        return jnp.einsum("bchw,dc->bdhw", x, wm) + bv[None, :, None, None]

    def rearrange(y, per_anchor):
        y = y.reshape(b, a, per_anchor, h, w)
        y = jnp.transpose(y, (0, 1, 3, 4, 2))
        return y.reshape(b, -1, per_anchor)

    ret = {
        "box_preds": rearrange(conv1x1(head.w_box, head.b_box),
                               head._box_code_size),
        "cls_preds": rearrange(conv1x1(head.w_cls, head.b_cls),
                               head._num_class),
    }
    if head._use_direction_classifier:
        ret["dir_cls_preds"] = rearrange(conv1x1(head.w_dir, head.b_dir),
                                         head._num_direction_bins)
    return ret


# --------------------------------- main ------------------------------------


if __name__ == "__main__":
    key = jax.random.PRNGKey(0)
    k_param, k_x1, k_x2 = jax.random.split(key, 3)

    num_filters = 32
    num_class = 4
    num_anchor_per_loc = 2
    box_code_size = 7
    num_direction_bins = 2

    head = DefaultHeadPallas(
        num_filters=num_filters,
        num_class=num_class,
        num_anchor_per_loc=num_anchor_per_loc,
        box_code_size=box_code_size,
        num_direction_bins=num_direction_bins,
        use_direction_classifier=True,
        encode_background_as_zeros=True,
        key=k_param,
        compute_dtype=None,   # set jnp.bfloat16 when the producer emits bf16
    )

    # ---- Main on-TPU run: lane-aligned spatial extent (hw % 128 == 0) ----
    B, H, W = 2, 16, 16
    x = jax.random.normal(k_x1, (B, num_filters, H, W), jnp.float32)

    out = jax.jit(head.__call__)(x)
    out = jax.tree_util.tree_map(jax.block_until_ready, out)

    ref = _reference(head, x)
    for name in ref:
        assert out[name].shape == ref[name].shape, name
        assert jnp.allclose(out[name], ref[name], atol=1e-4, rtol=1e-4), name

    assert out["box_preds"].shape == (B, num_anchor_per_loc * H * W, box_code_size)
    assert out["cls_preds"].shape == (B, num_anchor_per_loc * H * W, num_class)
    assert out["dir_cls_preds"].shape == (B, num_anchor_per_loc * H * W,
                                          num_direction_bins)

    # ---- Interpret-mode check of the ragged path (hw % 128 != 0):
    #      128-wide tiles + pl.cdiv grid -> multi-tile spatial pipelining with
    #      a masked remainder tile (the production 248x216-map case). ----
    head_ragged = DefaultHeadPallas(
        num_filters=num_filters,
        num_class=num_class,
        num_anchor_per_loc=num_anchor_per_loc,
        box_code_size=box_code_size,
        num_direction_bins=num_direction_bins,
        use_direction_classifier=True,
        encode_background_as_zeros=True,
        key=k_param,
        max_tile_hw=128,
    )
    Hr, Wr = 15, 14   # hw = 210: not a multiple of 128
    xr = jax.random.normal(k_x2, (B, num_filters, Hr, Wr), jnp.float32)
    with pltpu.force_tpu_interpret_mode():
        out_r = head_ragged(xr)
    out_r = jax.tree_util.tree_map(jax.block_until_ready, out_r)
    ref_r = _reference(head_ragged, xr)
    for name in ref_r:
        assert out_r[name].shape == ref_r[name].shape, name
        assert jnp.allclose(out_r[name], ref_r[name], atol=1e-4, rtol=1e-4), name

    print("KERNEL_OK")
</pallas_src>

<mosaic_0001>
module attributes {stable_mosaic.version = 11 : i64} {
  func.func @_head_matmul_kernel(%arg0: i32, %arg1: i32, %arg2: memref<26x32xf32, #tpu.memory_space<vmem>>, %arg3: memref<1x32x256xf32, #tpu.memory_space<vmem>>, %arg4: memref<26x1xf32, #tpu.memory_space<vmem>>, %arg5: memref<1x26x256xf32, #tpu.memory_space<vmem>>) attributes {dimension_semantics = [#tpu.dimension_semantics<parallel>, #tpu.dimension_semantics<parallel>], iteration_bounds = array<i64: 2, 1>, scalar_prefetch = 0 : i64, scratch_operands = 0 : i64, tpu.core_type = #tpu.core_type<tc>, window_params = [{pipeline_mode = #tpu.pipeline_mode<synchronous>, transform_indices = @transform_0, window_bounds = array<i64: 26, 32>}, {transform_indices = @transform_1, window_bounds = array<i64: 1, 32, 256>}, {pipeline_mode = #tpu.pipeline_mode<synchronous>, transform_indices = @transform_2, window_bounds = array<i64: 26, 1>}, {transform_indices = @transform_3, window_bounds = array<i64: 1, 26, 256>}]} {
    %c0 = arith.constant 0 : index
    %c0_0 = arith.constant 0 : index
    %c0_1 = arith.constant 0 : index
    %0 = vector.load %arg3[%c0, %c0_0, %c0_1] : memref<1x32x256xf32, #tpu.memory_space<vmem>>, vector<1x32x256xf32>
    %1 = vector.shape_cast %0 : vector<1x32x256xf32> to vector<32x256xf32>
    %c0_2 = arith.constant 0 : index
    %c0_3 = arith.constant 0 : index
    %2 = vector.load %arg2[%c0_2, %c0_3] : memref<26x32xf32, #tpu.memory_space<vmem>>, vector<26x32xf32>
    %cst = arith.constant dense<0.000000e+00> : vector<26x256xf32>
    %3 = tpu.matmul %2, %1, %cst {dimension_numbers = #tpu.dot_dimension_numbers<[1], [0], [0], [1], [0, 0, 1, 1], [], []>} : vector<26x32xf32>, vector<32x256xf32>, vector<26x256xf32> -> vector<26x256xf32>
    %c0_4 = arith.constant 0 : index
    %c0_5 = arith.constant 0 : index
    %4 = vector.load %arg4[%c0_4, %c0_5] : memref<26x1xf32, #tpu.memory_space<vmem>>, vector<26x1xf32>
    %5 = vector.broadcast %4 : vector<26x1xf32> to vector<26x256xf32>
    %6 = arith.addf %3, %5 : vector<26x256xf32>
    %c0_6 = arith.constant 0 : index
    %c0_7 = arith.constant 0 : index
    %c0_8 = arith.constant 0 : index
    %7 = vector.load %arg5[%c0_6, %c0_7, %c0_8] : memref<1x26x256xf32, #tpu.memory_space<vmem>>, vector<1x26x256xf32>
    %8 = vector.shape_cast %7 : vector<1x26x256xf32> to vector<26x256xf32>
    %9 = vector.shape_cast %6 : vector<26x256xf32> to vector<1x26x256xf32>
    tpu.vector_store %arg5[%c0_6, %c0_7, %c0_8], %9 {strides = array<i32>} : memref<1x26x256xf32, #tpu.memory_space<vmem>>, vector<1x26x256xf32>,
    return
  }
  func.func @transform_0(%arg0: i32, %arg1: i32) -> (i32, i32) {
    %c0_i32 = arith.constant 0 : i32
    %c0_i32_0 = arith.constant 0 : i32
    %c0_i32_1 = arith.constant 0 : i32
    return %c0_i32, %c0_i32_0 : i32, i32
  }
  func.func @transform_1(%arg0: i32, %arg1: i32) -> (i32, i32, i32) {
    %c0_i32 = arith.constant 0 : i32
    %c0_i32_0 = arith.constant 0 : i32
    return %arg0, %c0_i32, %arg1 : i32, i32, i32
  }
  func.func @transform_2(%arg0: i32, %arg1: i32) -> (i32, i32) {
    %c0_i32 = arith.constant 0 : i32
    %c0_i32_0 = arith.constant 0 : i32
    %c0_i32_1 = arith.constant 0 : i32
    return %c0_i32, %c0_i32_0 : i32, i32
  }
  func.func @transform_3(%arg0: i32, %arg1: i32) -> (i32, i32, i32) {
    %c0_i32 = arith.constant 0 : i32
    %c0_i32_0 = arith.constant 0 : i32
    return %arg0, %c0_i32, %arg1 : i32, i32, i32
  }
}

</mosaic_0001>

<llo_original>
// kernel: a_call__.1
$region0: #{a_call__.1}
  #allocation0 [shape = 'u32[]', space=smem, size = 0x4, offset = 0x4, fixed_abs, tag = 'smem constant byte address 0x4 - core index']
  #allocation1 [shape = 'u32[144,128]{1,0:T(1,128)}', space=vmem, size = 0x12000, scoped, tag = 'internal scratch']
  %s0 = inlined_call_operand.vmem [shape: f32[26,32], index: 0, kind: input, shape index: {}]
  %s1 = inlined_call_operand.vmem [shape: f32[2,32,256], index: 1, kind: input, shape index: {}]
  %s2 = inlined_call_operand.vmem [shape: f32[26,1], index: 2, kind: input, shape index: {}]
  %s3 = inlined_call_operand.vmem [shape: f32[2,26,256], index: 3, kind: output, shape index: {}]
  %s4 = sld [smem:[#allocation0]]
  $region45: #{a_call__.1} parent=0
    _
  %s6 = ssub.s32 1, %s4
  %s7 = scalar_select 0, %s6, %s4
  loop: start=0, step=1, limit=4
  $region2: #{a_call__.1} parent=0 // loop_pre_header
    _
  $region3: #{a_call__.1} parent=0 // loop_header
    %s9 = sphi 0, %s13
    %p10 = scmp.ge.s32.totalorder %s9, 4
    %s16 = sphi 0, %s28
    %s17 = sphi 0, %s24
    %s18 = sphi 0, %s16
    %s19 = sphi 0, %s17
    %s20 = sphi 0, %s18
    %s21 = sphi 0, %s19
    %s29 = sphi 0, %s29
    %s31 = sphi 0, %s29
    %s32 = sphi 0, %s31
    %s46 = sphi 0, %s32
    %s54 = sphi 0, %s56
    %s57 = sphi 0, %s54
    %s58 = sphi 0, %s57
    %s74 = sphi 0, %s58
    %s78 = sphi 0, %s78
    %s80 = sphi 0, %s78
    %s81 = sphi 0, %s80
    %s95 = sphi 0, %s81
    %s103 = sphi 0, %s105
    %s106 = sphi 0, %s103
    %s107 = sphi 0, %s106
    %s123 = sphi 0, %s107
  $region4: #{a_call__.1} parent=0 // loop_header_branch
    %12 = sbr.rel (%p10) target = $region8
  $region5: #{a_call__.1} parent=0 // loop_body
    %s14 = ssub.s32 %s9, 1
    %s15 = ssub.s32 %s9, 2
    %s22 = sadd.s32 1, %s17
    %p23 = scmp.ge.s32.totalorder %s22, 1
    %s24 = scalar_select %p23, 0, %s22
    %s25 = sadd.s32 1, %s16
    %s26 = scalar_select %p23, %s25, %s16
    %p27 = scmp.ge.s32.totalorder %s26, 2
    %s28 = scalar_select %p27, 0, %s26
    %s30 = sadd.s32 %s29, 1
    %p33 = scmp.eq.s32.totalorder %s9, 1
    %p34 = scmp.ne.s32.totalorder %s29, %s31
    %p35 = scmp.eq.s32.totalorder %s9, 0
    %p36 = por %p34, %p35
    %p37 = scmp.ne.s32.totalorder %s29, %s31
    %p38 = scmp.eq.s32.totalorder %s14, 1
    %p39 = por %p37, %p38
    %p40 = scmp.ne.s32.totalorder %s31, %s32
    %p41 = scmp.eq.s32.totalorder %s14, 0
    %p42 = por %p40, %p41
    %p43 = scmp.ne.s32.totalorder %s31, %s32
    %p44 = scmp.eq.s32.totalorder %s15, 1
    %p45 = por %p43, %p44
    %p47 = scmp.ne.s32.totalorder %s32, %s46
    %p48 = scmp.eq.s32.totalorder %s15, 0
    %p49 = por %p47, %p48
    %s50 = ssub.s32 %s16, %s28
    %s51 = ssub.s32 %s17, %s24
    %s52 = sor.u32 %s50, %s51
    %p53 = scmp.eq.s32.totalorder %s52, 0
    %s55 = sadd.s32 %s54, 1
    %s56 = scalar_select %p53, %s54, %s55
    %p59 = pneg %p53
    %p60 = scmp.eq.s32.totalorder %s9, 1
    %p61 = por %p59, %p60
    %p62 = scmp.ne.s32.totalorder %s54, %s57
    %p63 = scmp.eq.s32.totalorder %s9, 0
    %p64 = por %p62, %p63
    %p65 = scmp.ne.s32.totalorder %s54, %s57
    %p66 = scmp.eq.s32.totalorder %s14, 1
    %p67 = por %p65, %p66
    %p68 = scmp.ne.s32.totalorder %s57, %s58
    %p69 = scmp.eq.s32.totalorder %s14, 0
    %p70 = por %p68, %p69
    %p71 = scmp.ne.s32.totalorder %s57, %s58
    %p72 = scmp.eq.s32.totalorder %s15, 1
    %p73 = por %p71, %p72
    %p75 = scmp.ne.s32.totalorder %s58, %s74
    %p76 = scmp.eq.s32.totalorder %s15, 0
    %p77 = por %p75, %p76
    %s79 = sadd.s32 %s78, 1
    %p82 = scmp.eq.s32.totalorder %s9, 1
    %p83 = scmp.ne.s32.totalorder %s78, %s80
    %p84 = scmp.eq.s32.totalorder %s9, 0
    %p85 = por %p83, %p84
    %p86 = scmp.ne.s32.totalorder %s78, %s80
    %p87 = scmp.eq.s32.totalorder %s14, 1
    %p88 = por %p86, %p87
    %p89 = scmp.ne.s32.totalorder %s80, %s81
    %p90 = scmp.eq.s32.totalorder %s14, 0
    %p91 = por %p89, %p90
    %p92 = scmp.ne.s32.totalorder %s80, %s81
    %p93 = scmp.eq.s32.totalorder %s15, 1
    %p94 = por %p92, %p93
    %p96 = scmp.ne.s32.totalorder %s81, %s95
    %p97 = scmp.eq.s32.totalorder %s15, 0
    %p98 = por %p96, %p97
    %s99 = ssub.s32 %s16, %s28
    %s100 = ssub.s32 %s17, %s24
    %s101 = sor.u32 %s99, %s100
    %p102 = scmp.eq.s32.totalorder %s101, 0
    %s104 = sadd.s32 %s103, 1
    %s105 = scalar_select %p102, %s103, %s104
    %p108 = pneg %p102
    %p109 = scmp.eq.s32.totalorder %s9, 1
    %p110 = por %p108, %p109
    %p111 = scmp.ne.s32.totalorder %s103, %s106
    %p112 = scmp.eq.s32.totalorder %s9, 0
    %p113 = por %p111, %p112
    %p114 = scmp.ne.s32.totalorder %s103, %s106
    %p115 = scmp.eq.s32.totalorder %s14, 1
    %p116 = por %p114, %p115
    %p117 = scmp.ne.s32.totalorder %s106, %s107
    %p118 = scmp.eq.s32.totalorder %s14, 0
    %p119 = por %p117, %p118
    %p120 = scmp.ne.s32.totalorder %s106, %s107
    %p121 = scmp.eq.s32.totalorder %s15, 1
    %p122 = por %p120, %p121
    %p124 = scmp.ne.s32.totalorder %s107, %s123
    %p125 = scmp.eq.s32.totalorder %s15, 0
    %p126 = por %p124, %p125
    %p127 = scmp.le.s32.totalorder 1, %s9
    %p128 = scmp.lt.s32.totalorder %s9, 3
    %p129 = pnand %p127, %p128
    %p130 = pneg %p129
    // Predicated region
    $region9: #{a_call__.1} parent=5 // pred_check
      _
    $region10: #{a_call__.1} parent=5 // pred_check_branch
      %132 = sbr.rel (%p129) target = $region12
    $region11: #{a_call__.1} parent=5 // pred_region
      %s133 = ssub.s32 %s9, 1
      // Predicated region
      $region13: #{a_call__.1} parent=11 // pred_check
        %p134 = pneg %p42
      $region14: #{a_call__.1} parent=11 // pred_check_branch
        %136 = sbr.rel (%p134) target = $region16
      $region15: #{a_call__.1} parent=11 // pred_region
        _
      $region16: #{a_call__.1} parent=11 // pred_fallthru
        _
      // Predicated region
      $region17: #{a_call__.1} parent=11 // pred_check
        %p137 = pneg %p91
      $region18: #{a_call__.1} parent=11 // pred_check_branch
        %139 = sbr.rel (%p137) target = $region20
      $region19: #{a_call__.1} parent=11 // pred_region
        _
      $region20: #{a_call__.1} parent=11 // pred_fallthru
        _
    $region12: #{a_call__.1} parent=5 // pred_fallthru
      _
    %p140 = scmp.lt.s32.totalorder %s9, 2
    // Predicated region
    $region21: #{a_call__.1} parent=5 // pred_check
      %p141 = pneg %p140
    $region22: #{a_call__.1} parent=5 // pred_check_branch
      %143 = sbr.rel (%p141) target = $region24
    $region23: #{a_call__.1} parent=5 // pred_region
      // Predicated region
      $region25: #{a_call__.1} parent=23 // pred_check
        %p144 = pneg %p64
      $region26: #{a_call__.1} parent=23 // pred_check_branch
        %146 = sbr.rel (%p144) target = $region28
      $region27: #{a_call__.1} parent=23 // pred_region
        %s147 = smul.u32 2, %s17
        %p148 = scmp.lt.s32.totalorder %s16, 1
        %s149 = scalar_select %p148, %s16, 1
        %p150 = scmp.lt.s32.totalorder %s147, 1
        %s151 = scalar_select %p150, %s147, 1
        %s152 = smul.addr %s149, 8
        %s153 = sadd.s32 %s151, %s152
        %s154 = smul.addr %s153, 8
        %s155 = scalar_lea.vmem %s1, %s154
        %s156 = smul.u32 2, %s17
      $region28: #{a_call__.1} parent=23 // pred_fallthru
        _
    $region24: #{a_call__.1} parent=5 // pred_fallthru
      _
    %p157 = scmp.le.s32.totalorder 1, %s9
    %p158 = scmp.lt.s32.totalorder %s9, 3
    %p159 = pnand %p157, %p158
    %p160 = pneg %p159
    // Predicated region
    $region29: #{a_call__.1} parent=5 // pred_check
      _
    $region30: #{a_call__.1} parent=5 // pred_check_branch
      %162 = sbr.rel (%p159) target = $region32
    $region31: #{a_call__.1} parent=5 // pred_region
      %s163 = ssub.s32 %s9, 1
      %p164 = pneg %p42
      %p165 = pneg %p39
      %s166 = smul.u32 2, %s19
      %p167 = scmp.lt.s32.totalorder %s18, 1
      %s168 = scalar_select %p167, %s18, 1
      %p169 = scmp.lt.s32.totalorder %s166, 1
      %s170 = scalar_select %p169, %s166, 1
      %s171 = smul.addr %s168, 8
      %s172 = sadd.s32 %s170, %s171
      %s173 = smul.addr %s172, 8
      %s174 = scalar_lea.vmem %s1, %s173
      %p175 = pneg %p70
      %p176 = pneg %p67
      %p177 = pneg %p91
      %p178 = pneg %p88
      %p179 = pneg %p119
      %p180 = pneg %p116
      %s181 = smul.u32 2, %s19
      %p182 = scmp.lt.s32.totalorder %s18, 1
      %s183 = scalar_select %p182, %s18, 1
      %p184 = scmp.lt.s32.totalorder %s181, 1
      %s185 = scalar_select %p184, %s181, 1
      %s186 = smul.addr %s183, 8
      %s187 = sadd.s32 %s185, %s186
      %s188 = smul.addr %s187, 8
      %s189 = scalar_lea.vmem %s3, %s188
      %s190 = smul.u32 2, %s19
      %p191 = scmp.lt.s32.totalorder %s18, 1
      %s192 = scalar_select %p191, %s18, 1
      %p193 = scmp.lt.s32.totalorder %s190, 1
      %s194 = scalar_select %p193, %s190, 1
      %s195 = smul.addr %s192, 8
      %s196 = sadd.s32 %s194, %s195
      %s197 = smul.addr %s196, 8
      %s198 = scalar_lea.vmem %s1, %s197
      %s199 = smul.u32 2, %s19
      %s200 = smul.u32 2, %s19
      %p201 = scmp.lt.s32.totalorder %s18, 1
      %s202 = scalar_select %p201, %s18, 1
      %p203 = scmp.lt.s32.totalorder %s200, 1
      %s204 = scalar_select %p203, %s200, 1
      %s205 = smul.addr %s202, 8
      %s206 = sadd.s32 %s204, %s205
      %s207 = smul.addr %s206, 8
      %s208 = scalar_lea.vmem %s3, %s207
      %s209 = smul.u32 2, %s19
      %v210 = vld [vmem:[%s198] sm:$0xff]
      %v211 = vld [vmem:[%s198 + $0x8] sm:$0xff]
      %v212 = vld [vmem:[%s198 + $0x10] sm:$0xff]
      %v213 = vld [vmem:[%s198 + $0x18] sm:$0xff]
      %v214 = vld [vmem:[%s198 + $0x20] sm:$0xff]
      %v215 = vld [vmem:[%s198 + $0x28] sm:$0xff]
      %v216 = vld [vmem:[%s198 + $0x30] sm:$0xff]
      %v217 = vld [vmem:[%s198 + $0x38] sm:$0xff]
      %v218 = vld [vmem:[%s0] sm:$0xff]
      %v219 = vld [vmem:[%s0 + $0x8] sm:$0xff]
      %v220 = vld [vmem:[%s0 + $0x10] sm:$0xff]
      %v221 = vld [vmem:[%s0 + $0x18] sm:$0x3]
      %v222 = vld [vmem:[%s2] sm:$0xff]
      %v223 = vld [vmem:[%s2 + $0x8] sm:$0xff]
      %v224 = vld [vmem:[%s2 + $0x10] sm:$0xff]
      %v225 = vld [vmem:[%s2 + $0x18] sm:$0x3]
      %227 = vset.pattern.permute.xlu0 0
      %228 = vperm.xlu0 %227, %v222
      %v229 = vpop.permute.xlu0 %228
      %232 = vset.pattern.permute.xlu0 0
      %233 = vperm.xlu0 %232, %v223
      %v234 = vpop.permute.xlu0 %233
      %237 = vset.pattern.permute.xlu0 0
      %238 = vperm.xlu0 %237, %v224
      %v239 = vpop.permute.xlu0 %238
      %242 = vset.pattern.permute.xlu0 0
      %243 = vperm.xlu0 %242, %v225
      %v244 = vpop.permute.xlu0 %243
      %vm246 = vcmask 261120
      %v248 = vsel %vm246, %v218, 0
      %v251 = vsel %vm246, %v219, 0
      %v254 = vsel %vm246, %v220, 0
      %v257 = vsel %vm246, %v221, 0
      %259 = vmatprep.subr.mxu0 0.0
      %260 = vmatpush1.msra.mxu0 0.0
      %261 = vmatprep.subr.mxu0 0.0
      %262 = vmatpush1.msra.mxu0 0.0
      %263 = vmatprep.subr.mxu0 0.0
      %264 = vmatpush1.msra.mxu0 0.0
      %265 = vmatprep.subr.mxu0 0.0
      %266 = vmatpush1.msra.mxu0 0.0
      %267 = vmatprep.subr.mxu0 0.0
      %268 = vmatpush1.msra.mxu0 0.0
      %269 = vmatprep.subr.mxu0 0.0
      %270 = vmatpush1.msra.mxu0 0.0
      %271 = vmatprep.subr.mxu0 0.0
      %272 = vmatpush1.msra.mxu0 0.0
      %273 = vmatprep.subr.mxu0 0.0
      %274 = vmatpush1.msra.mxu0 0.0
      %275 = vmatprep.subr.mxu0 0.0
      %276 = vmatpush1.msra.mxu0 0.0
      %277 = vmatprep.subr.mxu0 0.0
      %278 = vmatpush1.msra.mxu0 0.0
      %279 = vmatprep.subr.mxu0 0.0
      %280 = vmatpush1.msra.mxu0 0.0
      %281 = vmatprep.subr.mxu0 0.0
      %282 = vmatpush1.msra.mxu0 0.0
      %283 = vmatprep.subr.mxu0 %v217
      %284 = vmatpush1.msra.mxu0 %v216
      %285 = vmatprep.subr.mxu0 %v215
      %286 = vmatpush1.msra.mxu0 %v214
      %287 = vmatprep.subr.mxu0 %v213
      %288 = vmatpush1.msra.mxu0 %v212
      %289 = vmatprep.subr.mxu0 %v211
      %290 = vmatpush1.msra.mxu0 %v210
      %291 = vmatprep.subr.mxu0 0.0
      %292 = vmatpush2.msra.mxu0 0.0
      %293 = vmatprep.subr.mxu0 0.0
      %294 = vmatpush2.msra.mxu0 0.0
      %295 = vmatprep.subr.mxu0 0.0
      %296 = vmatpush2.msra.mxu0 0.0
      %297 = vmatprep.subr.mxu0 0.0
      %298 = vmatpush2.msra.mxu0 0.0
      %299 = vmatprep.subr.mxu0 0.0
      %300 = vmatpush2.msra.mxu0 0.0
      %301 = vmatprep.subr.mxu0 0.0
      %302 = vmatpush2.msra.mxu0 0.0
      %303 = vmatprep.subr.mxu0 0.0
      %304 = vmatpush2.msra.mxu0 0.0
      %305 = vmatprep.subr.mxu0 0.0
      %306 = vmatpush2.msra.mxu0 0.0
      %307 = vmatprep.subr.mxu0 0.0
      %308 = vmatpush2.msra.mxu0 0.0
      %309 = vmatprep.subr.mxu0 0.0
      %310 = vmatpush2.msra.mxu0 0.0
      %311 = vmatprep.subr.mxu0 0.0
      %312 = vmatpush2.msra.mxu0 0.0
      %313 = vmatprep.subr.mxu0 0.0
      %314 = vmatpush2.msra.mxu0 0.0
      %315 = vmatprep.subr.mxu0 0.0
      %316 = vmatpush2.msra.mxu0 0.0
      %317 = vmatprep.subr.mxu0 0.0
      %318 = vmatpush2.msra.mxu0 0.0
      %319 = vmatprep.subr.mxu0 0.0
      %320 = vmatpush2.msra.mxu0 0.0
      %321 = vmatprep.subr.mxu0 0.0
      %322 = vmatpush2.msra.mxu0 0.0
      %323 = vmatprep.mubr.f32.mxu0 0.0
      %324 = vmatmul.mubr.f32.gmra.mxu0 %v248
      %v325 = vpop.f32.mrf.mxu0
      %v326 = vadd.f32 %v229, %v325
      %v327 = vpop.f32.mrf.mxu0
      %v328 = vadd.f32 %v229, %v327
      %329 = vmatprep.mubr.f32.mxu0 0.0
      %330 = vmatmul.mubr.f32.gmra.mxu0 %v251
      %v331 = vpop.f32.mrf.mxu0
      %v332 = vadd.f32 %v234, %v331
      %v333 = vpop.f32.mrf.mxu0
      %v334 = vadd.f32 %v234, %v333
      %335 = vmatprep.mubr.f32.mxu0 0.0
      %336 = vmatmul.mubr.f32.gmra.mxu0 %v254
      %v337 = vpop.f32.mrf.mxu0
      %v338 = vadd.f32 %v239, %v337
      %v339 = vpop.f32.mrf.mxu0
      %v340 = vadd.f32 %v239, %v339
      %341 = vmatprep.mubr.f32.mxu0 0.0
      %342 = vmatmul.mubr.f32.gmra.mxu0 %v257
      %v343 = vpop.f32.mrf.mxu0
      %v344 = vadd.f32 %v244, %v343
      %v345 = vpop.f32.mrf.mxu0
      %v346 = vadd.f32 %v244, %v345
      %347 = vdwg.mxu0
      %348 = vst [vmem:[%s208] sm:$0xff] %v326
      %349 = vst [vmem:[%s208 + $0x8] sm:$0xff] %v328
      %350 = vst [vmem:[%s208 + $0x10] sm:$0xff] %v332
      %351 = vst [vmem:[%s208 + $0x18] sm:$0xff] %v334
      %352 = vst [vmem:[%s208 + $0x20] sm:$0xff] %v338
      %353 = vst [vmem:[%s208 + $0x28] sm:$0xff] %v340
      %354 = vst [vmem:[%s208 + $0x30] sm:$0x3] %v344
      %355 = vst [vmem:[%s208 + $0x38] sm:$0x3] %v346
      %s356 = smul.u32 2, %s19
      %p357 = scmp.lt.s32.totalorder %s18, 1
      %s358 = scalar_select %p357, %s18, 1
      %p359 = scmp.lt.s32.totalorder %s356, 1
      %s360 = scalar_select %p359, %s356, 1
      %s361 = smul.addr %s358, 8
      %s362 = sadd.s32 %s360, %s361
      %s363 = smul.addr %s362, 8
      %s364 = scalar_lea.vmem %s3, %s363
      // Predicated region
      $region33: #{a_call__.1} parent=31 // pred_check
        %p365 = pneg %p116
      $region34: #{a_call__.1} parent=31 // pred_check_branch
        %367 = sbr.rel (%p365) target = $region36
      $region35: #{a_call__.1} parent=31 // pred_region
        %s368 = smul.u32 2, %s19
      $region36: #{a_call__.1} parent=31 // pred_fallthru
        _
    $region32: #{a_call__.1} parent=5 // pred_fallthru
      _
    %p369 = scmp.le.s32.totalorder 2, %s9
    // Predicated region
    $region37: #{a_call__.1} parent=5 // pred_check
      %p370 = pneg %p369
    $region38: #{a_call__.1} parent=5 // pred_check_branch
      %372 = sbr.rel (%p370) target = $region40
    $region39: #{a_call__.1} parent=5 // pred_region
      %s373 = ssub.s32 %s9, 2
      // Predicated region
      $region41: #{a_call__.1} parent=39 // pred_check
        %p374 = pneg %p122
      $region42: #{a_call__.1} parent=39 // pred_check_branch
        %376 = sbr.rel (%p374) target = $region44
      $region43: #{a_call__.1} parent=39 // pred_region
        %s377 = smul.u32 2, %s21
        %p378 = scmp.lt.s32.totalorder %s20, 1
        %s379 = scalar_select %p378, %s20, 1
        %p380 = scmp.lt.s32.totalorder %s377, 1
        %s381 = scalar_select %p380, %s377, 1
        %s382 = smul.addr %s379, 8
        %s383 = sadd.s32 %s381, %s382
        %s384 = smul.addr %s383, 8
        %s385 = scalar_lea.vmem %s3, %s384
      $region44: #{a_call__.1} parent=39 // pred_fallthru
        _
    $region40: #{a_call__.1} parent=5 // pred_fallthru
      _
  $region6: #{a_call__.1} parent=0 // loop_footer
    %s13 = sadd.s32 1, %s9
  $region7: #{a_call__.1} parent=0 // loop_footer_branch
    %8 = sbr.rel target = $region3
  $region8: #{a_call__.1} parent=0 // loop_exit
    _

</llo_original>
